<compile_context>
chip_gen: v6e
topology: v6e:2x2x1
jax: 0.10.0
libtpu: 0.0.40
codegen_flags: <defaults>
</compile_context>

<pallas_src>
import jax
import jax.numpy as jnp
from jax.experimental import pallas as pl
from jax.experimental.pallas import tpu as pltpu


# fused-output column layout
_COL_COMP = 0          # compliance prob  (sigmoid)
_COL_VIOL = (1, 6)     # violation logits (raw)
_COL_CONF = 6          # confidence       (sigmoid)
_OUT_W = 8             # padded lane width (col 7 is zero padding)


def compliance_kernel(x_ref, w1_ref, b1_ref, w2_ref, b2_ref,
                      wh1_ref, bh1_ref, wh2_ref, bh2_ref, out_ref):
    x = x_ref[...]

    # feature extractor: Linear -> ReLU -> (Dropout=id) -> Linear -> ReLU -> (Dropout=id)
    h = jnp.dot(x, w1_ref[...], preferred_element_type=jnp.float32) + b1_ref[...]
    h = jnp.maximum(h, 0.0)
    h = jnp.dot(h, w2_ref[...], preferred_element_type=jnp.float32) + b2_ref[...]
    feats = jnp.maximum(h, 0.0)

    # fused head layer 1: [cw1 | vw1 | fw1] -> one (TILE_B, 192) activation
    a = jnp.dot(feats, wh1_ref[...], preferred_element_type=jnp.float32) + bh1_ref[...]
    a = jnp.maximum(a, 0.0)

    # fused head layer 2: block-diagonal (192, 8) weight -> one lane-dense slab
    z = jnp.dot(a, wh2_ref[...], preferred_element_type=jnp.float32) + bh2_ref[...]

    # sigmoid only on the compliance (col 0) and confidence (col 6) columns
    col = jax.lax.broadcasted_iota(jnp.int32, z.shape, dimension=1)
    sig = (col == _COL_COMP) | (col == _COL_CONF)
    out_ref[...] = jnp.where(sig, jax.nn.sigmoid(z), z)


def pack_params(p):
    """Fuse the three heads into one layer-1 weight and one block-diagonal layer-2 weight."""
    hid = p["w1"].shape[1]
    half = hid // 2
    wh1 = jnp.concatenate([p["cw1"], p["vw1"], p["fw1"]], axis=1)   # (hid, 3*half)
    bh1 = jnp.concatenate([p["cb1"], p["vb1"], p["fb1"]], axis=1)   # (1, 3*half)
    wh2 = jnp.zeros((3 * half, _OUT_W), jnp.float32)
    wh2 = wh2.at[0 * half:1 * half, _COL_COMP:_COL_COMP + 1].set(p["cw2"])
    wh2 = wh2.at[1 * half:2 * half, _COL_VIOL[0]:_COL_VIOL[1]].set(p["vw2"])
    wh2 = wh2.at[2 * half:3 * half, _COL_CONF:_COL_CONF + 1].set(p["fw2"])
    bh2 = jnp.zeros((1, _OUT_W), jnp.float32)
    bh2 = bh2.at[:, _COL_COMP:_COL_COMP + 1].set(p["cb2"])
    bh2 = bh2.at[:, _COL_VIOL[0]:_COL_VIOL[1]].set(p["vb2"])
    bh2 = bh2.at[:, _COL_CONF:_COL_CONF + 1].set(p["fb2"])
    return {"w1": p["w1"], "b1": p["b1"], "w2": p["w2"], "b2": p["b2"],
            "wh1": wh1, "bh1": bh1, "wh2": wh2, "bh2": bh2}


def _round_up(n, m):
    return ((n + m - 1) // m) * m


def compliance_net_forward(x, packed, *, tile_b=512):
    """x: (B, input_dim) float32. packed: output of pack_params()."""
    B, d_in = x.shape
    hid = packed["w1"].shape[1]
    nh1 = packed["wh1"].shape[1]

    # Batch tile: multiple of 8 (sublane), capped so tiny batches use one tile.
    tile_b = min(tile_b, _round_up(max(B, 8), 8))
    b_pad = _round_up(B, tile_b)
    if b_pad != B:
        x = jnp.pad(x, ((0, b_pad - B), (0, 0)))
    grid = (b_pad // tile_b,)

    # x / output stream per batch tile; weights resident via constant index_map.
    x_spec = pl.BlockSpec((tile_b, d_in), lambda i: (i, 0))
    out_spec = pl.BlockSpec((tile_b, _OUT_W), lambda i: (i, 0))

    def resident(shape):
        return pl.BlockSpec(shape, lambda i: (0, 0))

    in_specs = [
        x_spec,
        resident(packed["w1"].shape), resident(packed["b1"].shape),
        resident(packed["w2"].shape), resident(packed["b2"].shape),
        resident(packed["wh1"].shape), resident(packed["bh1"].shape),
        resident(packed["wh2"].shape), resident(packed["bh2"].shape),
    ]

    flops = 2 * b_pad * (d_in * hid + hid * hid + hid * nh1 + nh1 * _OUT_W)
    weight_bytes = sum(int(packed[k].size) * 4 for k in packed)
    cost = pl.CostEstimate(
        flops=flops,
        transcendentals=2 * b_pad,                       # two sigmoids per row
        bytes_accessed=b_pad * (d_in + _OUT_W) * 4 + weight_bytes,
    )

    out = pl.pallas_call(
        compliance_kernel,
        out_shape=jax.ShapeDtypeStruct((b_pad, _OUT_W), jnp.float32),
        grid=grid,
        in_specs=in_specs,
        out_specs=out_spec,
        compiler_params=pltpu.CompilerParams(dimension_semantics=("parallel",)),
        cost_estimate=cost,
    )(x, packed["w1"], packed["b1"], packed["w2"], packed["b2"],
      packed["wh1"], packed["bh1"], packed["wh2"], packed["bh2"])

    out = out[:B]
    comp = out[:, _COL_COMP:_COL_COMP + 1]
    viol = out[:, _COL_VIOL[0]:_COL_VIOL[1]]
    conf = out[:, _COL_CONF:_COL_CONF + 1]
    return comp, viol, conf


def init_params(key, input_dim=64, hidden_dim=128):
    """Deterministic synthetic parameters. Weights stored as (in, out); biases as (1, out)."""
    half = hidden_dim // 2

    def lin(k, fan_in, fan_out):
        kw, kb = jax.random.split(k)
        bound = 1.0 / jnp.sqrt(fan_in)
        w = jax.random.uniform(kw, (fan_in, fan_out), jnp.float32, -bound, bound)
        b = jax.random.uniform(kb, (1, fan_out), jnp.float32, -bound, bound)
        return w, b

    ks = jax.random.split(key, 8)
    p = {}
    p["w1"], p["b1"] = lin(ks[0], input_dim, hidden_dim)
    p["w2"], p["b2"] = lin(ks[1], hidden_dim, hidden_dim)
    p["cw1"], p["cb1"] = lin(ks[2], hidden_dim, half)
    p["cw2"], p["cb2"] = lin(ks[3], half, 1)
    p["vw1"], p["vb1"] = lin(ks[4], hidden_dim, half)
    p["vw2"], p["vb2"] = lin(ks[5], half, 5)
    p["fw1"], p["fb1"] = lin(ks[6], hidden_dim, half)
    p["fw2"], p["fb2"] = lin(ks[7], half, 1)
    return p


def reference_forward(x, p):
    """Plain-JAX reference matching the PyTorch forward (dropout = identity at eval)."""
    relu = lambda t: jnp.maximum(t, 0.0)
    feats = relu(relu(x @ p["w1"] + p["b1"]) @ p["w2"] + p["b2"])
    comp = jax.nn.sigmoid(relu(feats @ p["cw1"] + p["cb1"]) @ p["cw2"] + p["cb2"])
    viol = relu(feats @ p["vw1"] + p["vb1"]) @ p["vw2"] + p["vb2"]
    conf = jax.nn.sigmoid(relu(feats @ p["fw1"] + p["fb1"]) @ p["fw2"] + p["fb2"])
    return comp, viol, conf


if __name__ == "__main__":
    key = jax.random.PRNGKey(0)
    kx, kp = jax.random.split(key)

    B, INPUT_DIM, HIDDEN_DIM = 8, 64, 128
    x = jax.random.normal(kx, (B, INPUT_DIM), dtype=jnp.float32)
    params = init_params(kp, INPUT_DIM, HIDDEN_DIM)
    packed = pack_params(params)

    comp, viol, conf = compliance_net_forward(x, packed)
    jax.block_until_ready((comp, viol, conf))

    # correctness check against pure-JAX reference
    rcomp, rviol, rconf = reference_forward(x, params)
    assert comp.shape == (B, 1) and viol.shape == (B, 5) and conf.shape == (B, 1)
    assert jnp.allclose(comp, rcomp, atol=1e-5, rtol=1e-5)
    assert jnp.allclose(viol, rviol, atol=1e-5, rtol=1e-5)
    assert jnp.allclose(conf, rconf, atol=1e-5, rtol=1e-5)

    print("KERNEL_OK")
</pallas_src>

<mosaic_0001>
module attributes {stable_mosaic.version = 11 : i64} {
  func.func @compliance_kernel(%arg0: i32, %arg1: memref<8x64xf32, #tpu.memory_space<vmem>>, %arg2: memref<64x128xf32, #tpu.memory_space<vmem>>, %arg3: memref<1x128xf32, #tpu.memory_space<vmem>>, %arg4: memref<128x128xf32, #tpu.memory_space<vmem>>, %arg5: memref<1x128xf32, #tpu.memory_space<vmem>>, %arg6: memref<128x192xf32, #tpu.memory_space<vmem>>, %arg7: memref<1x192xf32, #tpu.memory_space<vmem>>, %arg8: memref<192x8xf32, #tpu.memory_space<vmem>>, %arg9: memref<1x8xf32, #tpu.memory_space<vmem>>, %arg10: memref<8x8xf32, #tpu.memory_space<vmem>>) attributes {dimension_semantics = [#tpu.dimension_semantics<parallel>], iteration_bounds = array<i64: 1>, scalar_prefetch = 0 : i64, scratch_operands = 0 : i64, tpu.core_type = #tpu.core_type<tc>, window_params = [{transform_indices = @transform_0, window_bounds = array<i64: 8, 64>}, {pipeline_mode = #tpu.pipeline_mode<synchronous>, transform_indices = @transform_1, window_bounds = array<i64: 64, 128>}, {pipeline_mode = #tpu.pipeline_mode<synchronous>, transform_indices = @transform_2, window_bounds = array<i64: 1, 128>}, {pipeline_mode = #tpu.pipeline_mode<synchronous>, transform_indices = @transform_3, window_bounds = array<i64: 128, 128>}, {pipeline_mode = #tpu.pipeline_mode<synchronous>, transform_indices = @transform_4, window_bounds = array<i64: 1, 128>}, {pipeline_mode = #tpu.pipeline_mode<synchronous>, transform_indices = @transform_5, window_bounds = array<i64: 128, 192>}, {pipeline_mode = #tpu.pipeline_mode<synchronous>, transform_indices = @transform_6, window_bounds = array<i64: 1, 192>}, {pipeline_mode = #tpu.pipeline_mode<synchronous>, transform_indices = @transform_7, window_bounds = array<i64: 192, 8>}, {pipeline_mode = #tpu.pipeline_mode<synchronous>, transform_indices = @transform_8, window_bounds = array<i64: 1, 8>}, {transform_indices = @transform_9, window_bounds = array<i64: 8, 8>}]} {
    %c0 = arith.constant 0 : index
    %c0_0 = arith.constant 0 : index
    %0 = vector.load %arg1[%c0, %c0_0] : memref<8x64xf32, #tpu.memory_space<vmem>>, vector<8x64xf32>
    %c0_1 = arith.constant 0 : index
    %c0_2 = arith.constant 0 : index
    %1 = vector.load %arg2[%c0_1, %c0_2] : memref<64x128xf32, #tpu.memory_space<vmem>>, vector<64x128xf32>
    %cst = arith.constant dense<0.000000e+00> : vector<8x128xf32>
    %2 = tpu.matmul %0, %1, %cst {dimension_numbers = #tpu.dot_dimension_numbers<[1], [0], [0], [1], [0, 0, 1, 1], [], []>} : vector<8x64xf32>, vector<64x128xf32>, vector<8x128xf32> -> vector<8x128xf32>
    %c0_3 = arith.constant 0 : index
    %c0_4 = arith.constant 0 : index
    %3 = vector.load %arg3[%c0_3, %c0_4] : memref<1x128xf32, #tpu.memory_space<vmem>>, vector<1x128xf32>
    %4 = vector.broadcast %3 : vector<1x128xf32> to vector<8x128xf32>
    %5 = arith.addf %2, %4 : vector<8x128xf32>
    %cst_5 = arith.constant 0.000000e+00 : f32
    %6 = vector.broadcast %cst_5 : f32 to vector<8x128xf32>
    %7 = arith.maximumf %5, %6 : vector<8x128xf32>
    %c0_6 = arith.constant 0 : index
    %c0_7 = arith.constant 0 : index
    %8 = vector.load %arg4[%c0_6, %c0_7] : memref<128x128xf32, #tpu.memory_space<vmem>>, vector<128x128xf32>
    %cst_8 = arith.constant dense<0.000000e+00> : vector<8x128xf32>
    %9 = tpu.matmul %7, %8, %cst_8 {dimension_numbers = #tpu.dot_dimension_numbers<[1], [0], [0], [1], [0, 0, 1, 1], [], []>} : vector<8x128xf32>, vector<128x128xf32>, vector<8x128xf32> -> vector<8x128xf32>
    %c0_9 = arith.constant 0 : index
    %c0_10 = arith.constant 0 : index
    %10 = vector.load %arg5[%c0_9, %c0_10] : memref<1x128xf32, #tpu.memory_space<vmem>>, vector<1x128xf32>
    %11 = vector.broadcast %10 : vector<1x128xf32> to vector<8x128xf32>
    %12 = arith.addf %9, %11 : vector<8x128xf32>
    %cst_11 = arith.constant 0.000000e+00 : f32
    %13 = vector.broadcast %cst_11 : f32 to vector<8x128xf32>
    %14 = arith.maximumf %12, %13 : vector<8x128xf32>
    %c0_12 = arith.constant 0 : index
    %c0_13 = arith.constant 0 : index
    %15 = vector.load %arg6[%c0_12, %c0_13] : memref<128x192xf32, #tpu.memory_space<vmem>>, vector<128x192xf32>
    %cst_14 = arith.constant dense<0.000000e+00> : vector<8x192xf32>
    %16 = tpu.matmul %14, %15, %cst_14 {dimension_numbers = #tpu.dot_dimension_numbers<[1], [0], [0], [1], [0, 0, 1, 1], [], []>} : vector<8x128xf32>, vector<128x192xf32>, vector<8x192xf32> -> vector<8x192xf32>
    %c0_15 = arith.constant 0 : index
    %c0_16 = arith.constant 0 : index
    %17 = vector.load %arg7[%c0_15, %c0_16] : memref<1x192xf32, #tpu.memory_space<vmem>>, vector<1x192xf32>
    %18 = vector.broadcast %17 : vector<1x192xf32> to vector<8x192xf32>
    %19 = arith.addf %16, %18 : vector<8x192xf32>
    %cst_17 = arith.constant 0.000000e+00 : f32
    %20 = vector.broadcast %cst_17 : f32 to vector<8x192xf32>
    %21 = arith.maximumf %19, %20 : vector<8x192xf32>
    %c0_18 = arith.constant 0 : index
    %c0_19 = arith.constant 0 : index
    %22 = vector.load %arg8[%c0_18, %c0_19] : memref<192x8xf32, #tpu.memory_space<vmem>>, vector<192x8xf32>
    %cst_20 = arith.constant dense<0.000000e+00> : vector<8x8xf32>
    %23 = tpu.matmul %21, %22, %cst_20 {dimension_numbers = #tpu.dot_dimension_numbers<[1], [0], [0], [1], [0, 0, 1, 1], [], []>} : vector<8x192xf32>, vector<192x8xf32>, vector<8x8xf32> -> vector<8x8xf32>
    %c0_21 = arith.constant 0 : index
    %c0_22 = arith.constant 0 : index
    %24 = vector.load %arg9[%c0_21, %c0_22] : memref<1x8xf32, #tpu.memory_space<vmem>>, vector<1x8xf32>
    %25 = vector.broadcast %24 : vector<1x8xf32> to vector<8x8xf32>
    %26 = arith.addf %23, %25 : vector<8x8xf32>
    %27 = tpu.iota {dimensions = array<i32: 1>} : vector<8x8xi32>
    %c0_i32 = arith.constant 0 : i32
    %28 = vector.broadcast %c0_i32 : i32 to vector<8x8xi32>
    %29 = arith.cmpi eq, %27, %28 : vector<8x8xi32>
    %c6_i32 = arith.constant 6 : i32
    %30 = vector.broadcast %c6_i32 : i32 to vector<8x8xi32>
    %31 = arith.cmpi eq, %27, %30 : vector<8x8xi32>
    %32 = arith.ori %29, %31 : vector<8x8xi1>
    %33 = arith.negf %26 : vector<8x8xf32>
    %34 = math.exp %33 : vector<8x8xf32>
    %cst_23 = arith.constant 1.000000e+00 : f32
    %35 = vector.broadcast %cst_23 : f32 to vector<8x8xf32>
    %36 = arith.addf %35, %34 : vector<8x8xf32>
    %37 = arith.divf %35, %36 : vector<8x8xf32>
    %38 = arith.select %32, %37, %26 : vector<8x8xi1>, vector<8x8xf32>
    %c0_24 = arith.constant 0 : index
    %c0_25 = arith.constant 0 : index
    %39 = vector.load %arg10[%c0_24, %c0_25] : memref<8x8xf32, #tpu.memory_space<vmem>>, vector<8x8xf32>
    tpu.vector_store %arg10[%c0_24, %c0_25], %38 {strides = array<i32>} : memref<8x8xf32, #tpu.memory_space<vmem>>, vector<8x8xf32>,
    return
  }
  func.func @transform_0(%arg0: i32) -> (i32, i32) {
    %c0_i32 = arith.constant 0 : i32
    %c0_i32_0 = arith.constant 0 : i32
    return %arg0, %c0_i32 : i32, i32
  }
  func.func @transform_1(%arg0: i32) -> (i32, i32) {
    %c0_i32 = arith.constant 0 : i32
    %c0_i32_0 = arith.constant 0 : i32
    %c0_i32_1 = arith.constant 0 : i32
    return %c0_i32, %c0_i32_0 : i32, i32
  }
  func.func @transform_2(%arg0: i32) -> (i32, i32) {
    %c0_i32 = arith.constant 0 : i32
    %c0_i32_0 = arith.constant 0 : i32
    %c0_i32_1 = arith.constant 0 : i32
    return %c0_i32, %c0_i32_0 : i32, i32
  }
  func.func @transform_3(%arg0: i32) -> (i32, i32) {
    %c0_i32 = arith.constant 0 : i32
    %c0_i32_0 = arith.constant 0 : i32
    %c0_i32_1 = arith.constant 0 : i32
    return %c0_i32, %c0_i32_0 : i32, i32
  }
  func.func @transform_4(%arg0: i32) -> (i32, i32) {
    %c0_i32 = arith.constant 0 : i32
    %c0_i32_0 = arith.constant 0 : i32
    %c0_i32_1 = arith.constant 0 : i32
    return %c0_i32, %c0_i32_0 : i32, i32
  }
  func.func @transform_5(%arg0: i32) -> (i32, i32) {
    %c0_i32 = arith.constant 0 : i32
    %c0_i32_0 = arith.constant 0 : i32
    %c0_i32_1 = arith.constant 0 : i32
    return %c0_i32, %c0_i32_0 : i32, i32
  }
  func.func @transform_6(%arg0: i32) -> (i32, i32) {
    %c0_i32 = arith.constant 0 : i32
    %c0_i32_0 = arith.constant 0 : i32
    %c0_i32_1 = arith.constant 0 : i32
    return %c0_i32, %c0_i32_0 : i32, i32
  }
  func.func @transform_7(%arg0: i32) -> (i32, i32) {
    %c0_i32 = arith.constant 0 : i32
    %c0_i32_0 = arith.constant 0 : i32
    %c0_i32_1 = arith.constant 0 : i32
    return %c0_i32, %c0_i32_0 : i32, i32
  }
  func.func @transform_8(%arg0: i32) -> (i32, i32) {
    %c0_i32 = arith.constant 0 : i32
    %c0_i32_0 = arith.constant 0 : i32
    %c0_i32_1 = arith.constant 0 : i32
    return %c0_i32, %c0_i32_0 : i32, i32
  }
  func.func @transform_9(%arg0: i32) -> (i32, i32) {
    %c0_i32 = arith.constant 0 : i32
    %c0_i32_0 = arith.constant 0 : i32
    return %arg0, %c0_i32 : i32, i32
  }
}

</mosaic_0001>

<llo_original>
// kernel: tpu_custom_call.1
$region0: #{tpu_custom_call.1}
  #allocation0 [shape = 'u32[]', space=smem, size = 0x4, offset = 0x4, fixed_abs, tag = 'smem constant byte address 0x4 - core index']
  #allocation1 [shape = 'u32[144,128]{1,0:T(1,128)}', space=vmem, size = 0x12000, scoped, tag = 'internal scratch']
  %s0 = inlined_call_operand.vmem [shape: f32[8,64], index: 0, kind: input, shape index: {}]
  %s1 = inlined_call_operand.vmem [shape: f32[64,128], index: 1, kind: input, shape index: {}]
  %s2 = inlined_call_operand.vmem [shape: f32[1,128], index: 2, kind: input, shape index: {}]
  %s3 = inlined_call_operand.vmem [shape: f32[128,128], index: 3, kind: input, shape index: {}]
  %s4 = inlined_call_operand.vmem [shape: f32[1,128], index: 4, kind: input, shape index: {}]
  %s5 = inlined_call_operand.vmem [shape: f32[128,192], index: 5, kind: input, shape index: {}]
  %s6 = inlined_call_operand.vmem [shape: f32[1,192], index: 6, kind: input, shape index: {}]
  %s7 = inlined_call_operand.vmem [shape: f32[192,8], index: 7, kind: input, shape index: {}]
  %s8 = inlined_call_operand.vmem [shape: f32[1,8], index: 8, kind: input, shape index: {}]
  %s9 = inlined_call_operand.hbm [shape: f32[8,8], index: 9, kind: output, shape index: {}]
  %s10 = sld [smem:[#allocation0]]
  $region46: #{tpu_custom_call.1} parent=0
    _
  %s12 = ssub.s32 1, %s10
  %s13 = scalar_select 0, %s12, %s10
  $region1: #{tpu_custom_call.1} parent=0
    #allocation2 [shape = 'u8[4096]{0}', space=vmem, size = 0x1000, scoped, tag = 'output window, operand 0, single buffered']
    #allocation3 [shape = 's32[1]{0}', space=sflag, size = 0x4, scoped, tag = 'scoped memory for tpu_custom_call.1']
    %14 = vsyncpa [#allocation3], 0
    // Predicated region
    $region2: #{tpu_custom_call.1} parent=1 // pred_check
      _
    $region3: #{tpu_custom_call.1} parent=1 // pred_check_branch
      %16 = sbr.rel (0) target = $region5
    $region4: #{tpu_custom_call.1} parent=1 // pred_region
      _
    $region5: #{tpu_custom_call.1} parent=1 // pred_fallthru
      _
    // Predicated region
    $region6: #{tpu_custom_call.1} parent=1 // pred_check
      _
    $region7: #{tpu_custom_call.1} parent=1 // pred_check_branch
      %18 = sbr.rel (0) target = $region9
    $region8: #{tpu_custom_call.1} parent=1 // pred_region
      _
    $region9: #{tpu_custom_call.1} parent=1 // pred_fallthru
      _
    // Predicated region
    $region10: #{tpu_custom_call.1} parent=1 // pred_check
      _
    $region11: #{tpu_custom_call.1} parent=1 // pred_check_branch
      %20 = sbr.rel (0) target = $region13
    $region12: #{tpu_custom_call.1} parent=1 // pred_region
      _
    $region13: #{tpu_custom_call.1} parent=1 // pred_fallthru
      _
    // Predicated region
    $region14: #{tpu_custom_call.1} parent=1 // pred_check
      _
    $region15: #{tpu_custom_call.1} parent=1 // pred_check_branch
      %22 = sbr.rel (0) target = $region17
    $region16: #{tpu_custom_call.1} parent=1 // pred_region
      _
    $region17: #{tpu_custom_call.1} parent=1 // pred_fallthru
      _
    // Predicated region
    $region18: #{tpu_custom_call.1} parent=1 // pred_check
      _
    $region19: #{tpu_custom_call.1} parent=1 // pred_check_branch
      %24 = sbr.rel (0) target = $region21
    $region20: #{tpu_custom_call.1} parent=1 // pred_region
      _
    $region21: #{tpu_custom_call.1} parent=1 // pred_fallthru
      _
    // Predicated region
    $region22: #{tpu_custom_call.1} parent=1 // pred_check
      _
    $region23: #{tpu_custom_call.1} parent=1 // pred_check_branch
      %26 = sbr.rel (0) target = $region25
    $region24: #{tpu_custom_call.1} parent=1 // pred_region
      _
    $region25: #{tpu_custom_call.1} parent=1 // pred_fallthru
      _
    // Predicated region
    $region26: #{tpu_custom_call.1} parent=1 // pred_check
      _
    $region27: #{tpu_custom_call.1} parent=1 // pred_check_branch
      %28 = sbr.rel (0) target = $region29
    $region28: #{tpu_custom_call.1} parent=1 // pred_region
      _
    $region29: #{tpu_custom_call.1} parent=1 // pred_fallthru
      _
    // Predicated region
    $region30: #{tpu_custom_call.1} parent=1 // pred_check
      _
    $region31: #{tpu_custom_call.1} parent=1 // pred_check_branch
      %30 = sbr.rel (0) target = $region33
    $region32: #{tpu_custom_call.1} parent=1 // pred_region
      _
    $region33: #{tpu_custom_call.1} parent=1 // pred_fallthru
      _
    // Predicated region
    $region34: #{tpu_custom_call.1} parent=1 // pred_check
      _
    $region35: #{tpu_custom_call.1} parent=1 // pred_check_branch
      %32 = sbr.rel (0) target = $region37
    $region36: #{tpu_custom_call.1} parent=1 // pred_region
      _
    $region37: #{tpu_custom_call.1} parent=1 // pred_fallthru
      _
    %v33 = vld [vmem:[%s0] sm:$0xff]
    %v34 = vld [vmem:[%s1] sm:$0xff]
    %v35 = vld [vmem:[%s1 + $0x8] sm:$0xff]
    %v36 = vld [vmem:[%s1 + $0x10] sm:$0xff]
    %v37 = vld [vmem:[%s1 + $0x18] sm:$0xff]
    %v38 = vld [vmem:[%s1 + $0x20] sm:$0xff]
    %v39 = vld [vmem:[%s1 + $0x28] sm:$0xff]
    %v40 = vld [vmem:[%s1 + $0x30] sm:$0xff]
    %v41 = vld [vmem:[%s1 + $0x38] sm:$0xff]
    %v42 = vld [vmem:[%s2] sm:$0x1]
    %v44 = vlaneseq
    %v45 = vshrl.u32 %v44, 7
    %v46 = vsub.s32 0, %v45
    %v47 = vrot.slane %v42, %v46
    %vm49 = vcmask 523264
    %v51 = vsel %vm49, %v33, 0
    %53 = vmatprep.subr.mxu0 0.0
    %54 = vmatpush1.msra.mxu0 0.0
    %55 = vmatprep.subr.mxu0 0.0
    %56 = vmatpush1.msra.mxu0 0.0
    %57 = vmatprep.subr.mxu0 0.0
    %58 = vmatpush1.msra.mxu0 0.0
    %59 = vmatprep.subr.mxu0 0.0
    %60 = vmatpush1.msra.mxu0 0.0
    %61 = vmatprep.subr.mxu0 0.0
    %62 = vmatpush1.msra.mxu0 0.0
    %63 = vmatprep.subr.mxu0 0.0
    %64 = vmatpush1.msra.mxu0 0.0
    %65 = vmatprep.subr.mxu0 0.0
    %66 = vmatpush1.msra.mxu0 0.0
    %67 = vmatprep.subr.mxu0 0.0
    %68 = vmatpush1.msra.mxu0 0.0
    %69 = vmatprep.subr.mxu0 0.0
    %70 = vmatpush1.msra.mxu0 %v41
    %71 = vmatprep.subr.mxu0 0.0
    %72 = vmatpush1.msra.mxu0 %v40
    %73 = vmatprep.subr.mxu0 0.0
    %74 = vmatpush1.msra.mxu0 %v39
    %75 = vmatprep.subr.mxu0 0.0
    %76 = vmatpush1.msra.mxu0 %v38
    %77 = vmatprep.subr.mxu0 0.0
    %78 = vmatpush1.msra.mxu0 %v37
    %79 = vmatprep.subr.mxu0 0.0
    %80 = vmatpush1.msra.mxu0 %v36
    %81 = vmatprep.subr.mxu0 0.0
    %82 = vmatpush1.msra.mxu0 %v35
    %83 = vmatprep.subr.mxu0 0.0
    %84 = vmatpush1.msra.mxu0 %v34
    %85 = vmatprep.subr.mxu0 0.0
    %86 = vmatpush2.msra.mxu0 0.0
    %87 = vmatprep.subr.mxu0 0.0
    %88 = vmatpush2.msra.mxu0 0.0
    %89 = vmatprep.subr.mxu0 0.0
    %90 = vmatpush2.msra.mxu0 0.0
    %91 = vmatprep.subr.mxu0 0.0
    %92 = vmatpush2.msra.mxu0 0.0
    %93 = vmatprep.subr.mxu0 0.0
    %94 = vmatpush2.msra.mxu0 0.0
    %95 = vmatprep.subr.mxu0 0.0
    %96 = vmatpush2.msra.mxu0 0.0
    %97 = vmatprep.subr.mxu0 0.0
    %98 = vmatpush2.msra.mxu0 0.0
    %99 = vmatprep.subr.mxu0 0.0
    %100 = vmatpush2.msra.mxu0 0.0
    %101 = vmatprep.subr.mxu0 0.0
    %102 = vmatpush2.msra.mxu0 0.0
    %103 = vmatprep.subr.mxu0 0.0
    %104 = vmatpush2.msra.mxu0 0.0
    %105 = vmatprep.subr.mxu0 0.0
    %106 = vmatpush2.msra.mxu0 0.0
    %107 = vmatprep.subr.mxu0 0.0
    %108 = vmatpush2.msra.mxu0 0.0
    %109 = vmatprep.subr.mxu0 0.0
    %110 = vmatpush2.msra.mxu0 0.0
    %111 = vmatprep.subr.mxu0 0.0
    %112 = vmatpush2.msra.mxu0 0.0
    %113 = vmatprep.subr.mxu0 0.0
    %114 = vmatpush2.msra.mxu0 0.0
    %115 = vmatprep.subr.mxu0 0.0
    %116 = vmatpush2.msra.mxu0 0.0
    %117 = vmatprep.mubr.f32.mxu0 0.0
    %118 = vmatmul.mubr.f32.gmra.mxu0 %v51
    %v119 = vpop.f32.mrf.mxu0
    %v120 = vadd.f32 %v47, %v119
    %v121 = vpop.f32.mrf.mxu0
    %122 = vdwg.mxu0
    %v123 = vmax.f32 %v120, 0.0
    %v124 = vld [vmem:[%s3] sm:$0xff]
    %v125 = vld [vmem:[%s3 + $0x8] sm:$0xff]
    %v126 = vld [vmem:[%s3 + $0x10] sm:$0xff]
    %v127 = vld [vmem:[%s3 + $0x18] sm:$0xff]
    %v128 = vld [vmem:[%s3 + $0x20] sm:$0xff]
    %v129 = vld [vmem:[%s3 + $0x28] sm:$0xff]
    %v130 = vld [vmem:[%s3 + $0x30] sm:$0xff]
    %v131 = vld [vmem:[%s3 + $0x38] sm:$0xff]
    %v132 = vld [vmem:[%s3 + $0x40] sm:$0xff]
    %v133 = vld [vmem:[%s3 + $0x48] sm:$0xff]
    %v134 = vld [vmem:[%s3 + $0x50] sm:$0xff]
    %v135 = vld [vmem:[%s3 + $0x58] sm:$0xff]
    %v136 = vld [vmem:[%s3 + $0x60] sm:$0xff]
    %v137 = vld [vmem:[%s3 + $0x68] sm:$0xff]
    %v138 = vld [vmem:[%s3 + $0x70] sm:$0xff]
    %v139 = vld [vmem:[%s3 + $0x78] sm:$0xff]
    %v140 = vld [vmem:[%s4] sm:$0x1]
    %v142 = vlaneseq
    %v143 = vshrl.u32 %v142, 7
    %v144 = vsub.s32 0, %v143
    %v145 = vrot.slane %v140, %v144
    %147 = vmatprep.subr.mxu0 0.0
    %148 = vmatpush1.msra.mxu0 %v139
    %149 = vmatprep.subr.mxu0 0.0
    %150 = vmatpush1.msra.mxu0 %v138
    %151 = vmatprep.subr.mxu0 0.0
    %152 = vmatpush1.msra.mxu0 %v137
    %153 = vmatprep.subr.mxu0 0.0
    %154 = vmatpush1.msra.mxu0 %v136
    %155 = vmatprep.subr.mxu0 0.0
    %156 = vmatpush1.msra.mxu0 %v135
    %157 = vmatprep.subr.mxu0 0.0
    %158 = vmatpush1.msra.mxu0 %v134
    %159 = vmatprep.subr.mxu0 0.0
    %160 = vmatpush1.msra.mxu0 %v133
    %161 = vmatprep.subr.mxu0 0.0
    %162 = vmatpush1.msra.mxu0 %v132
    %163 = vmatprep.subr.mxu0 0.0
    %164 = vmatpush1.msra.mxu0 %v131
    %165 = vmatprep.subr.mxu0 0.0
    %166 = vmatpush1.msra.mxu0 %v130
    %167 = vmatprep.subr.mxu0 0.0
    %168 = vmatpush1.msra.mxu0 %v129
    %169 = vmatprep.subr.mxu0 0.0
    %170 = vmatpush1.msra.mxu0 %v128
    %171 = vmatprep.subr.mxu0 0.0
    %172 = vmatpush1.msra.mxu0 %v127
    %173 = vmatprep.subr.mxu0 0.0
    %174 = vmatpush1.msra.mxu0 %v126
    %175 = vmatprep.subr.mxu0 0.0
    %176 = vmatpush1.msra.mxu0 %v125
    %177 = vmatprep.subr.mxu0 0.0
    %178 = vmatpush1.msra.mxu0 %v124
    %179 = vmatprep.subr.mxu0 0.0
    %180 = vmatpush2.msra.mxu0 0.0
    %181 = vmatprep.subr.mxu0 0.0
    %182 = vmatpush2.msra.mxu0 0.0
    %183 = vmatprep.subr.mxu0 0.0
    %184 = vmatpush2.msra.mxu0 0.0
    %185 = vmatprep.subr.mxu0 0.0
    %186 = vmatpush2.msra.mxu0 0.0
    %187 = vmatprep.subr.mxu0 0.0
    %188 = vmatpush2.msra.mxu0 0.0
    %189 = vmatprep.subr.mxu0 0.0
    %190 = vmatpush2.msra.mxu0 0.0
    %191 = vmatprep.subr.mxu0 0.0
    %192 = vmatpush2.msra.mxu0 0.0
    %193 = vmatprep.subr.mxu0 0.0
    %194 = vmatpush2.msra.mxu0 0.0
    %195 = vmatprep.subr.mxu0 0.0
    %196 = vmatpush2.msra.mxu0 0.0
    %197 = vmatprep.subr.mxu0 0.0
    %198 = vmatpush2.msra.mxu0 0.0
    %199 = vmatprep.subr.mxu0 0.0
    %200 = vmatpush2.msra.mxu0 0.0
    %201 = vmatprep.subr.mxu0 0.0
    %202 = vmatpush2.msra.mxu0 0.0
    %203 = vmatprep.subr.mxu0 0.0
    %204 = vmatpush2.msra.mxu0 0.0
    %205 = vmatprep.subr.mxu0 0.0
    %206 = vmatpush2.msra.mxu0 0.0
    %207 = vmatprep.subr.mxu0 0.0
    %208 = vmatpush2.msra.mxu0 0.0
    %209 = vmatprep.subr.mxu0 0.0
    %210 = vmatpush2.msra.mxu0 0.0
    %211 = vmatprep.mubr.f32.mxu0 0.0
    %212 = vmatmul.mubr.f32.gmra.mxu0 %v123
    %v213 = vpop.f32.mrf.mxu0
    %v214 = vadd.f32 %v145, %v213
    %v215 = vpop.f32.mrf.mxu0
    %216 = vdwg.mxu0
    %v217 = vmax.f32 %v214, 0.0
    %v218 = vld [vmem:[%s5] sm:$0xff]
    %v219 = vld [vmem:[%s5 + $0x8] sm:$0xff]
    %v220 = vld [vmem:[%s5 + $0x10] sm:$0xff]
    %v221 = vld [vmem:[%s5 + $0x18] sm:$0xff]
    %v222 = vld [vmem:[%s5 + $0x20] sm:$0xff]
    %v223 = vld [vmem:[%s5 + $0x28] sm:$0xff]
    %v224 = vld [vmem:[%s5 + $0x30] sm:$0xff]
    %v225 = vld [vmem:[%s5 + $0x38] sm:$0xff]
    %v226 = vld [vmem:[%s5 + $0x40] sm:$0xff]
    %v227 = vld [vmem:[%s5 + $0x48] sm:$0xff]
    %v228 = vld [vmem:[%s5 + $0x50] sm:$0xff]
    %v229 = vld [vmem:[%s5 + $0x58] sm:$0xff]
    %v230 = vld [vmem:[%s5 + $0x60] sm:$0xff]
    %v231 = vld [vmem:[%s5 + $0x68] sm:$0xff]
    %v232 = vld [vmem:[%s5 + $0x70] sm:$0xff]
    %v233 = vld [vmem:[%s5 + $0x78] sm:$0xff]
    %v234 = vld [vmem:[%s5 + $0x80] sm:$0xff]
    %v235 = vld [vmem:[%s5 + $0x88] sm:$0xff]
    %v236 = vld [vmem:[%s5 + $0x90] sm:$0xff]
    %v237 = vld [vmem:[%s5 + $0x98] sm:$0xff]
    %v238 = vld [vmem:[%s5 + $0xa0] sm:$0xff]
    %v239 = vld [vmem:[%s5 + $0xa8] sm:$0xff]
    %v240 = vld [vmem:[%s5 + $0xb0] sm:$0xff]
    %v241 = vld [vmem:[%s5 + $0xb8] sm:$0xff]
    %v242 = vld [vmem:[%s5 + $0xc0] sm:$0xff]
    %v243 = vld [vmem:[%s5 + $0xc8] sm:$0xff]
    %v244 = vld [vmem:[%s5 + $0xd0] sm:$0xff]
    %v245 = vld [vmem:[%s5 + $0xd8] sm:$0xff]
    %v246 = vld [vmem:[%s5 + $0xe0] sm:$0xff]
    %v247 = vld [vmem:[%s5 + $0xe8] sm:$0xff]
    %v248 = vld [vmem:[%s5 + $0xf0] sm:$0xff]
    %v249 = vld [vmem:[%s5 + $0xf8] sm:$0xff]
    %v250 = vld [vmem:[%s6] sm:$0x3]
    %v252 = vlaneseq
    %v253 = vshrl.u32 %v252, 7
    %v254 = vsub.s32 0, %v253
    %v255 = vrot.slane %v250, %v254
    %v256 = vlaneseq
    %v257 = vshrl.u32 %v256, 7
    %v258 = vsub.s32 1, %v257
    %v259 = vrot.slane %v250, %v258
    %262 = vmatprep.subr.mxu0 %v249
    %263 = vmatpush1.msra.mxu0 %v248
    %264 = vmatprep.subr.mxu0 %v247
    %265 = vmatpush1.msra.mxu0 %v246
    %266 = vmatprep.subr.mxu0 %v245
    %267 = vmatpush1.msra.mxu0 %v244
    %268 = vmatprep.subr.mxu0 %v243
    %269 = vmatpush1.msra.mxu0 %v242
    %270 = vmatprep.subr.mxu0 %v241
    %271 = vmatpush1.msra.mxu0 %v240
    %272 = vmatprep.subr.mxu0 %v239
    %273 = vmatpush1.msra.mxu0 %v238
    %274 = vmatprep.subr.mxu0 %v237
    %275 = vmatpush1.msra.mxu0 %v236
    %276 = vmatprep.subr.mxu0 %v235
    %277 = vmatpush1.msra.mxu0 %v234
    %278 = vmatprep.subr.mxu0 %v233
    %279 = vmatpush1.msra.mxu0 %v232
    %280 = vmatprep.subr.mxu0 %v231
    %281 = vmatpush1.msra.mxu0 %v230
    %282 = vmatprep.subr.mxu0 %v229
    %283 = vmatpush1.msra.mxu0 %v228
    %284 = vmatprep.subr.mxu0 %v227
    %285 = vmatpush1.msra.mxu0 %v226
    %286 = vmatprep.subr.mxu0 %v225
    %287 = vmatpush1.msra.mxu0 %v224
    %288 = vmatprep.subr.mxu0 %v223
    %289 = vmatpush1.msra.mxu0 %v222
    %290 = vmatprep.subr.mxu0 %v221
    %291 = vmatpush1.msra.mxu0 %v220
    %292 = vmatprep.subr.mxu0 %v219
    %293 = vmatpush1.msra.mxu0 %v218
    %294 = vmatprep.subr.mxu0 0.0
    %295 = vmatpush2.msra.mxu0 0.0
    %296 = vmatprep.subr.mxu0 0.0
    %297 = vmatpush2.msra.mxu0 0.0
    %298 = vmatprep.subr.mxu0 0.0
    %299 = vmatpush2.msra.mxu0 0.0
    %300 = vmatprep.subr.mxu0 0.0
    %301 = vmatpush2.msra.mxu0 0.0
    %302 = vmatprep.subr.mxu0 0.0
    %303 = vmatpush2.msra.mxu0 0.0
    %304 = vmatprep.subr.mxu0 0.0
    %305 = vmatpush2.msra.mxu0 0.0
    %306 = vmatprep.subr.mxu0 0.0
    %307 = vmatpush2.msra.mxu0 0.0
    %308 = vmatprep.subr.mxu0 0.0
    %309 = vmatpush2.msra.mxu0 0.0
    %310 = vmatprep.subr.mxu0 0.0
    %311 = vmatpush2.msra.mxu0 0.0
    %312 = vmatprep.subr.mxu0 0.0
    %313 = vmatpush2.msra.mxu0 0.0
    %314 = vmatprep.subr.mxu0 0.0
    %315 = vmatpush2.msra.mxu0 0.0
    %316 = vmatprep.subr.mxu0 0.0
    %317 = vmatpush2.msra.mxu0 0.0
    %318 = vmatprep.subr.mxu0 0.0
    %319 = vmatpush2.msra.mxu0 0.0
    %320 = vmatprep.subr.mxu0 0.0
    %321 = vmatpush2.msra.mxu0 0.0
    %322 = vmatprep.subr.mxu0 0.0
    %323 = vmatpush2.msra.mxu0 0.0
    %324 = vmatprep.subr.mxu0 0.0
    %325 = vmatpush2.msra.mxu0 0.0
    %326 = vmatprep.mubr.f32.mxu0 0.0
    %327 = vmatmul.mubr.f32.gmra.mxu0 %v217
    %v328 = vpop.f32.mrf.mxu0
    %v329 = vadd.f32 %v255, %v328
    %v330 = vpop.f32.mrf.mxu0
    %v331 = vadd.f32 %v259, %v330
    %332 = vdwg.mxu0
    %v333 = vmax.f32 %v329, 0.0
    %v334 = vmax.f32 %v331, 0.0
    %v335 = vld [vmem:[%s7] sm:$0xff]
    %v336 = vld [vmem:[%s7 + $0x8] sm:$0xff]
    %v337 = vld [vmem:[%s7 + $0x10] sm:$0xff]
    %v338 = vld [vmem:[%s7 + $0x18] sm:$0xff]
    %v339 = vld [vmem:[%s7 + $0x20] sm:$0xff]
    %v340 = vld [vmem:[%s7 + $0x28] sm:$0xff]
    %v341 = vld [vmem:[%s7 + $0x30] sm:$0xff]
    %v342 = vld [vmem:[%s7 + $0x38] sm:$0xff]
    %v343 = vld [vmem:[%s7 + $0x40] sm:$0xff]
    %v344 = vld [vmem:[%s7 + $0x48] sm:$0xff]
    %v345 = vld [vmem:[%s7 + $0x50] sm:$0xff]
    %v346 = vld [vmem:[%s7 + $0x58] sm:$0xff]
    %v347 = vld [vmem:[%s7 + $0x60] sm:$0xff]
    %v348 = vld [vmem:[%s7 + $0x68] sm:$0xff]
    %v349 = vld [vmem:[%s7 + $0x70] sm:$0xff]
    %v350 = vld [vmem:[%s7 + $0x78] sm:$0xff]
    %v351 = vld [vmem:[%s7 + $0x80] sm:$0xff]
    %v352 = vld [vmem:[%s7 + $0x88] sm:$0xff]
    %v353 = vld [vmem:[%s7 + $0x90] sm:$0xff]
    %v354 = vld [vmem:[%s7 + $0x98] sm:$0xff]
    %v355 = vld [vmem:[%s7 + $0xa0] sm:$0xff]
    %v356 = vld [vmem:[%s7 + $0xa8] sm:$0xff]
    %v357 = vld [vmem:[%s7 + $0xb0] sm:$0xff]
    %v358 = vld [vmem:[%s7 + $0xb8] sm:$0xff]
    %v359 = vld [vmem:[%s8] sm:$0x1]
    %v361 = vlaneseq
    %v362 = vshrl.u32 %v361, 7
    %v363 = vsub.s32 0, %v362
    %v364 = vrot.slane %v359, %v363
    %v367 = vsel %vm49, %v334, 0
    %369 = vmatprep.subr.mxu0 0.0
    %370 = vmatpush1.msra.mxu0 %v350
    %371 = vmatprep.subr.mxu0 0.0
    %372 = vmatpush1.msra.mxu0 %v349
    %373 = vmatprep.subr.mxu0 0.0
    %374 = vmatpush1.msra.mxu0 %v348
    %375 = vmatprep.subr.mxu0 0.0
    %376 = vmatpush1.msra.mxu0 %v347
    %377 = vmatprep.subr.mxu0 0.0
    %378 = vmatpush1.msra.mxu0 %v346
    %379 = vmatprep.subr.mxu0 0.0
    %380 = vmatpush1.msra.mxu0 %v345
    %381 = vmatprep.subr.mxu0 0.0
    %382 = vmatpush1.msra.mxu0 %v344
    %383 = vmatprep.subr.mxu0 0.0
    %384 = vmatpush1.msra.mxu0 %v343
    %385 = vmatprep.subr.mxu0 0.0
    %386 = vmatpush1.msra.mxu0 %v342
    %387 = vmatprep.subr.mxu0 0.0
    %388 = vmatpush1.msra.mxu0 %v341
    %389 = vmatprep.subr.mxu0 0.0
    %390 = vmatpush1.msra.mxu0 %v340
    %391 = vmatprep.subr.mxu0 0.0
    %392 = vmatpush1.msra.mxu0 %v339
    %393 = vmatprep.subr.mxu0 0.0
    %394 = vmatpush1.msra.mxu0 %v338
    %395 = vmatprep.subr.mxu0 0.0
    %396 = vmatpush1.msra.mxu0 %v337
    %397 = vmatprep.subr.mxu0 0.0
    %398 = vmatpush1.msra.mxu0 %v336
    %399 = vmatprep.subr.mxu0 0.0
    %400 = vmatpush1.msra.mxu0 %v335
    %401 = vmatprep.subr.mxu0 0.0
    %402 = vmatpush2.msra.mxu0 0.0
    %403 = vmatprep.subr.mxu0 0.0
    %404 = vmatpush2.msra.mxu0 0.0
    %405 = vmatprep.subr.mxu0 0.0
    %406 = vmatpush2.msra.mxu0 0.0
    %407 = vmatprep.subr.mxu0 0.0
    %408 = vmatpush2.msra.mxu0 0.0
    %409 = vmatprep.subr.mxu0 0.0
    %410 = vmatpush2.msra.mxu0 0.0
    %411 = vmatprep.subr.mxu0 0.0
    %412 = vmatpush2.msra.mxu0 0.0
    %413 = vmatprep.subr.mxu0 0.0
    %414 = vmatpush2.msra.mxu0 0.0
    %415 = vmatprep.subr.mxu0 0.0
    %416 = vmatpush2.msra.mxu0 0.0
    %417 = vmatprep.subr.mxu0 0.0
    %418 = vmatpush2.msra.mxu0 %v358
    %419 = vmatprep.subr.mxu0 0.0
    %420 = vmatpush2.msra.mxu0 %v357
    %421 = vmatprep.subr.mxu0 0.0
    %422 = vmatpush2.msra.mxu0 %v356
    %423 = vmatprep.subr.mxu0 0.0
    %424 = vmatpush2.msra.mxu0 %v355
    %425 = vmatprep.subr.mxu0 0.0
    %426 = vmatpush2.msra.mxu0 %v354
    %427 = vmatprep.subr.mxu0 0.0
    %428 = vmatpush2.msra.mxu0 %v353
    %429 = vmatprep.subr.mxu0 0.0
    %430 = vmatpush2.msra.mxu0 %v352
    %431 = vmatprep.subr.mxu0 0.0
    %432 = vmatpush2.msra.mxu0 %v351
    %433 = vmatprep.mubr.f32.mxu0 %v367
    %434 = vmatmul.mubr.f32.gmra.mxu0 %v333
    %v435 = vpop.f32.mrf.mxu0
    %v436 = vadd.f32 %v364, %v435
    %v437 = vpop.f32.mrf.mxu0
    %438 = vdwg.mxu0
    %v439 = vlaneseq
    %v440 = vand.u32 %v439, 127
    %vm441 = vcmp.eq.s32.totalorder %v440, 0
    %vm442 = vcmp.eq.s32.totalorder %v440, 6
    %vm443 = vmor %vm441, %vm442
    %v444 = vxor.u32 %v436, 2147483648
    %v445 = vmul.f32 %v444, 1.442695
    %v446 = vpow.pop %v445
    %v447 = vadd.f32 %v446, 1.0
    %v448 = vrcp.pop %v447
    %v449 = vmul.f32 1.0, %v448
    %v450 = vsel %vm443, %v449, %v436
    %vm451 = vcmask 64512
    %452 = vst.msk [vmem:[#allocation2] sm:$0xff] %vm451, %v450
    // Predicated region
    $region38: #{tpu_custom_call.1} parent=1 // pred_check
      _
    $region39: #{tpu_custom_call.1} parent=1 // pred_check_branch
      %454 = sbr.rel (0) target = $region41
    $region40: #{tpu_custom_call.1} parent=1 // pred_region
      %s456 = ssub.s32 128, 128
      %457 = vsyncadd [#allocation3], %s456
      %s459 = sshll.u32 [#allocation2], 4
      %s460 = int_to_ptr.vmem [resolvable:$true] %s459
      %462 = dma.vmem_to_hbm [thread:$0]  %s460, 128, %s9, [#allocation3]
    $region41: #{tpu_custom_call.1} parent=1 // pred_fallthru
      _
    // Predicated region
    $region42: #{tpu_custom_call.1} parent=1 // pred_check
      _
    $region43: #{tpu_custom_call.1} parent=1 // pred_check_branch
      %464 = sbr.rel (0) target = $region45
    $region44: #{tpu_custom_call.1} parent=1 // pred_region
      %465 = dma.done [#allocation3], 128
    $region45: #{tpu_custom_call.1} parent=1 // pred_fallthru
      _
    %466 = vsyncpa [#allocation3], 1

</llo_original>
